<compile_context>
chip_gen: v7x
topology: tpu7x:2x2x1
jax: 0.10.0
libtpu: 0.0.40
codegen_flags: <defaults>
</compile_context>

<pallas_src>
import jax
import jax.numpy as jnp
from jax.experimental import pallas as pl
from jax.experimental.pallas import tpu as pltpu


def actor_kernel(x_ref, w1_ref, b1_ref, w2_ref, b2_ref, w3_ref, b3_ref, out_ref):
    # x: (in_dim, block_b)  -- batch on the lane axis everywhere below.
    x = x_ref[...]

    # linear1 + relu : (H, in) @ (in, B) -> (H, B)
    h1 = jnp.dot(w1_ref[...], x, preferred_element_type=jnp.float32) + b1_ref[...]
    h1 = jnp.maximum(h1, 0.0)

    # linear2 + relu : (H, H) @ (H, B) -> (H, B)
    h2 = jnp.dot(w2_ref[...], h1, preferred_element_type=jnp.float32) + b2_ref[...]
    h2 = jnp.maximum(h2, 0.0)

    # fused heads : (2, H) @ (H, B) -> (2, B)
    #   row 0 = linear3_1 (weights/bias pre-scaled by 0.5)
    #   row 1 = linear3_2
    logits = jnp.dot(w3_ref[...], h2, preferred_element_type=jnp.float32) + b3_ref[...]

    # single EUP transcendental pass: sigmoid(z) == 0.5*tanh(z/2) + 0.5
    t = jnp.tanh(logits)
    out_ref[0:1, :] = 0.5 * t[0:1, :] + 0.5   # sigmoid head
    out_ref[1:2, :] = t[1:2, :]               # tanh head


def _round_up(x, m):
    return ((x + m - 1) // m) * m


def actor_forward(state, params, *, block_b=4096):
    """state: (B, input_size) f32 -> action: (B, 2) f32."""
    w1, b1, w2, b2, w3, b3 = params          # PyTorch (out, in) orientation
    B, in_dim = state.shape
    H = w1.shape[0]

    # sigmoid-as-tanh rewrite: pre-scale the sigmoid head (row 0) by 0.5.
    head_scale = jnp.array([[0.5], [1.0]], jnp.float32)
    w3s = w3 * head_scale
    b3s = b3 * head_scale

    # ---- choose the batch block (lane axis => multiple of 128) ----
    block_b = _round_up(max(block_b, 128), 128)
    if B <= 256:
        # small-batch fast path: one small block, minimal lane padding
        bb = _round_up(max(B, 1), 128)
    elif B <= block_b:
        # split so num_blocks >= 2 -> both v7x TensorCores get work
        bb = _round_up(pl.cdiv(B, 2), 128)
    else:
        bb = block_b
    num_blocks = pl.cdiv(B, bb)
    B_pad = num_blocks * bb

    # feature-major input: (in_dim, B_pad), batch on lanes
    xT = state.T
    if B_pad != B:
        xT = jnp.pad(xT, ((0, 0), (0, B_pad - B)))

    flops = 2 * B_pad * (in_dim * H + H * H + H * 2)
    bytes_accessed = 4 * (
        B_pad * in_dim            # state
        + H * in_dim + H          # w1, b1
        + H * H + H               # w2, b2
        + 2 * H + 2               # w3, b3
        + B_pad * 2               # output
    )
    cost = pl.CostEstimate(
        flops=flops,
        transcendentals=2 * B_pad,
        bytes_accessed=bytes_accessed,
    )

    def resident(arr):
        # Whole array, same block every grid step -> stays resident in VMEM.
        return pl.BlockSpec(arr.shape, lambda i: (0, 0))

    out = pl.pallas_call(
        actor_kernel,
        out_shape=jax.ShapeDtypeStruct((2, B_pad), jnp.float32),
        grid=(num_blocks,),
        in_specs=[
            pl.BlockSpec((in_dim, bb), lambda i: (0, i)),   # state^T tile
            resident(w1),
            resident(b1),
            resident(w2),
            resident(b2),
            resident(w3s),
            resident(b3s),
        ],
        out_specs=pl.BlockSpec((2, bb), lambda i: (0, i)),  # lane-dense output
        compiler_params=pltpu.CompilerParams(
            dimension_semantics=("parallel",),
            vmem_limit_bytes=48 * 1024 * 1024,              # v7x-safe, big blocks
        ),
        cost_estimate=cost,
    )(xT, w1, b1, w2, b2, w3s, b3s)

    # back to (B, 2) to match the PyTorch module's output layout
    return out[:, :B].T


def xavier_uniform(key, out_dim, in_dim):
    # matches torch.nn.init.xavier_uniform_ (gain=1) on a (out, in) weight
    limit = jnp.sqrt(6.0 / (in_dim + out_dim))
    return jax.random.uniform(key, (out_dim, in_dim), jnp.float32, -limit, limit)


def init_actor_params(key, input_size, hidden_size):
    k1, k2, k3, k4 = jax.random.split(key, 4)
    # weights kept in PyTorch (out, in) orientation; biases are column vectors
    w1 = xavier_uniform(k1, hidden_size, input_size)
    b1 = jnp.zeros((hidden_size, 1), jnp.float32)
    w2 = xavier_uniform(k2, hidden_size, hidden_size)
    b2 = jnp.zeros((hidden_size, 1), jnp.float32)
    # fuse linear3_1 and linear3_2 into one (2, hidden) weight
    w3_1 = xavier_uniform(k3, 1, hidden_size)
    w3_2 = xavier_uniform(k4, 1, hidden_size)
    w3 = jnp.concatenate([w3_1, w3_2], axis=0)
    b3 = jnp.zeros((2, 1), jnp.float32)
    return (w1, b1, w2, b2, w3, b3)


def actor_reference(state, params):
    """Pure-JAX reference for correctness check (uses the *unscaled* params)."""
    w1, b1, w2, b2, w3, b3 = params
    h1 = jax.nn.relu(state @ w1.T + b1.T)
    h2 = jax.nn.relu(h1 @ w2.T + b2.T)
    logits = h2 @ w3.T + b3.T
    a0 = jax.nn.sigmoid(logits[:, 0:1])
    a1 = jnp.tanh(logits[:, 1:2])
    return jnp.concatenate([a0, a1], axis=1)


if __name__ == "__main__":
    input_size = 8      # state dim
    hidden_size = 32
    batch = 2

    key = jax.random.PRNGKey(0)
    k_params, k_state = jax.random.split(key)

    params = init_actor_params(k_params, input_size, hidden_size)
    state = jax.random.normal(k_state, (batch, input_size), jnp.float32)

    out = actor_forward(state, params)
    out = jax.block_until_ready(out)

    ref = actor_reference(state, params)
    assert out.shape == (batch, 2), out.shape
    assert jnp.allclose(out, ref, atol=1e-5, rtol=1e-5), (out, ref)

    print("KERNEL_OK")
</pallas_src>

<mosaic_0001>
module attributes {stable_mosaic.version = 11 : i64} {
  func.func @actor_kernel(%arg0: i32, %arg1: memref<8x128xf32, #tpu.memory_space<vmem>>, %arg2: memref<32x8xf32, #tpu.memory_space<vmem>>, %arg3: memref<32x1xf32, #tpu.memory_space<vmem>>, %arg4: memref<32x32xf32, #tpu.memory_space<vmem>>, %arg5: memref<32x1xf32, #tpu.memory_space<vmem>>, %arg6: memref<2x32xf32, #tpu.memory_space<vmem>>, %arg7: memref<2x1xf32, #tpu.memory_space<vmem>>, %arg8: memref<2x128xf32, #tpu.memory_space<vmem>>) attributes {dimension_semantics = [#tpu.dimension_semantics<parallel>], iteration_bounds = array<i64: 1>, scalar_prefetch = 0 : i64, scratch_operands = 0 : i64, tpu.core_type = #tpu.core_type<tc>, window_params = [{transform_indices = @transform_0, window_bounds = array<i64: 8, 128>}, {pipeline_mode = #tpu.pipeline_mode<synchronous>, transform_indices = @transform_1, window_bounds = array<i64: 32, 8>}, {pipeline_mode = #tpu.pipeline_mode<synchronous>, transform_indices = @transform_2, window_bounds = array<i64: 32, 1>}, {pipeline_mode = #tpu.pipeline_mode<synchronous>, transform_indices = @transform_3, window_bounds = array<i64: 32, 32>}, {pipeline_mode = #tpu.pipeline_mode<synchronous>, transform_indices = @transform_4, window_bounds = array<i64: 32, 1>}, {pipeline_mode = #tpu.pipeline_mode<synchronous>, transform_indices = @transform_5, window_bounds = array<i64: 2, 32>}, {pipeline_mode = #tpu.pipeline_mode<synchronous>, transform_indices = @transform_6, window_bounds = array<i64: 2, 1>}, {transform_indices = @transform_7, window_bounds = array<i64: 2, 128>}]} {
    %c0 = arith.constant 0 : index
    %c0_0 = arith.constant 0 : index
    %0 = vector.load %arg1[%c0, %c0_0] : memref<8x128xf32, #tpu.memory_space<vmem>>, vector<8x128xf32>
    %c0_1 = arith.constant 0 : index
    %c0_2 = arith.constant 0 : index
    %1 = vector.load %arg2[%c0_1, %c0_2] : memref<32x8xf32, #tpu.memory_space<vmem>>, vector<32x8xf32>
    %cst = arith.constant dense<0.000000e+00> : vector<32x128xf32>
    %2 = tpu.matmul %1, %0, %cst {dimension_numbers = #tpu.dot_dimension_numbers<[1], [0], [0], [1], [0, 0, 1, 1], [], []>} : vector<32x8xf32>, vector<8x128xf32>, vector<32x128xf32> -> vector<32x128xf32>
    %c0_3 = arith.constant 0 : index
    %c0_4 = arith.constant 0 : index
    %3 = vector.load %arg3[%c0_3, %c0_4] : memref<32x1xf32, #tpu.memory_space<vmem>>, vector<32x1xf32>
    %4 = vector.broadcast %3 : vector<32x1xf32> to vector<32x128xf32>
    %5 = arith.addf %2, %4 : vector<32x128xf32>
    %cst_5 = arith.constant 0.000000e+00 : f32
    %6 = vector.broadcast %cst_5 : f32 to vector<32x128xf32>
    %7 = arith.maximumf %5, %6 : vector<32x128xf32>
    %c0_6 = arith.constant 0 : index
    %c0_7 = arith.constant 0 : index
    %8 = vector.load %arg4[%c0_6, %c0_7] : memref<32x32xf32, #tpu.memory_space<vmem>>, vector<32x32xf32>
    %cst_8 = arith.constant dense<0.000000e+00> : vector<32x128xf32>
    %9 = tpu.matmul %8, %7, %cst_8 {dimension_numbers = #tpu.dot_dimension_numbers<[1], [0], [0], [1], [0, 0, 1, 1], [], []>} : vector<32x32xf32>, vector<32x128xf32>, vector<32x128xf32> -> vector<32x128xf32>
    %c0_9 = arith.constant 0 : index
    %c0_10 = arith.constant 0 : index
    %10 = vector.load %arg5[%c0_9, %c0_10] : memref<32x1xf32, #tpu.memory_space<vmem>>, vector<32x1xf32>
    %11 = vector.broadcast %10 : vector<32x1xf32> to vector<32x128xf32>
    %12 = arith.addf %9, %11 : vector<32x128xf32>
    %cst_11 = arith.constant 0.000000e+00 : f32
    %13 = vector.broadcast %cst_11 : f32 to vector<32x128xf32>
    %14 = arith.maximumf %12, %13 : vector<32x128xf32>
    %c0_12 = arith.constant 0 : index
    %c0_13 = arith.constant 0 : index
    %15 = vector.load %arg6[%c0_12, %c0_13] : memref<2x32xf32, #tpu.memory_space<vmem>>, vector<2x32xf32>
    %cst_14 = arith.constant dense<0.000000e+00> : vector<2x128xf32>
    %16 = tpu.matmul %15, %14, %cst_14 {dimension_numbers = #tpu.dot_dimension_numbers<[1], [0], [0], [1], [0, 0, 1, 1], [], []>} : vector<2x32xf32>, vector<32x128xf32>, vector<2x128xf32> -> vector<2x128xf32>
    %c0_15 = arith.constant 0 : index
    %c0_16 = arith.constant 0 : index
    %17 = vector.load %arg7[%c0_15, %c0_16] : memref<2x1xf32, #tpu.memory_space<vmem>>, vector<2x1xf32>
    %18 = vector.broadcast %17 : vector<2x1xf32> to vector<2x128xf32>
    %19 = arith.addf %16, %18 : vector<2x128xf32>
    %20 = math.tanh %19 : vector<2x128xf32>
    %21 = vector.extract_strided_slice %20 {offsets = [0, 0], sizes = [1, 128], strides = [1, 1]} : vector<2x128xf32> to vector<1x128xf32>
    %cst_17 = arith.constant 5.000000e-01 : f32
    %22 = vector.broadcast %cst_17 : f32 to vector<1x128xf32>
    %23 = arith.mulf %22, %21 : vector<1x128xf32>
    %cst_18 = arith.constant 5.000000e-01 : f32
    %24 = vector.broadcast %cst_18 : f32 to vector<1x128xf32>
    %25 = arith.addf %23, %24 : vector<1x128xf32>
    %c0_19 = arith.constant 0 : index
    %c0_20 = arith.constant 0 : index
    %26 = vector.load %arg8[%c0_19, %c0_20] : memref<2x128xf32, #tpu.memory_space<vmem>>, vector<1x128xf32>
    tpu.vector_store %arg8[%c0_19, %c0_20], %25 {strides = array<i32>} : memref<2x128xf32, #tpu.memory_space<vmem>>, vector<1x128xf32>,
    %27 = vector.extract_strided_slice %20 {offsets = [1, 0], sizes = [1, 128], strides = [1, 1]} : vector<2x128xf32> to vector<1x128xf32>
    %c1 = arith.constant 1 : index
    %c0_21 = arith.constant 0 : index
    %28 = vector.load %arg8[%c1, %c0_21] : memref<2x128xf32, #tpu.memory_space<vmem>>, vector<1x128xf32>
    tpu.vector_store %arg8[%c1, %c0_21], %27 {strides = array<i32>} : memref<2x128xf32, #tpu.memory_space<vmem>>, vector<1x128xf32>,
    return
  }
  func.func @transform_0(%arg0: i32) -> (i32, i32) {
    %c0_i32 = arith.constant 0 : i32
    %c0_i32_0 = arith.constant 0 : i32
    return %c0_i32, %arg0 : i32, i32
  }
  func.func @transform_1(%arg0: i32) -> (i32, i32) {
    %c0_i32 = arith.constant 0 : i32
    %c0_i32_0 = arith.constant 0 : i32
    %c0_i32_1 = arith.constant 0 : i32
    return %c0_i32, %c0_i32_0 : i32, i32
  }
  func.func @transform_2(%arg0: i32) -> (i32, i32) {
    %c0_i32 = arith.constant 0 : i32
    %c0_i32_0 = arith.constant 0 : i32
    %c0_i32_1 = arith.constant 0 : i32
    return %c0_i32, %c0_i32_0 : i32, i32
  }
  func.func @transform_3(%arg0: i32) -> (i32, i32) {
    %c0_i32 = arith.constant 0 : i32
    %c0_i32_0 = arith.constant 0 : i32
    %c0_i32_1 = arith.constant 0 : i32
    return %c0_i32, %c0_i32_0 : i32, i32
  }
  func.func @transform_4(%arg0: i32) -> (i32, i32) {
    %c0_i32 = arith.constant 0 : i32
    %c0_i32_0 = arith.constant 0 : i32
    %c0_i32_1 = arith.constant 0 : i32
    return %c0_i32, %c0_i32_0 : i32, i32
  }
  func.func @transform_5(%arg0: i32) -> (i32, i32) {
    %c0_i32 = arith.constant 0 : i32
    %c0_i32_0 = arith.constant 0 : i32
    %c0_i32_1 = arith.constant 0 : i32
    return %c0_i32, %c0_i32_0 : i32, i32
  }
  func.func @transform_6(%arg0: i32) -> (i32, i32) {
    %c0_i32 = arith.constant 0 : i32
    %c0_i32_0 = arith.constant 0 : i32
    %c0_i32_1 = arith.constant 0 : i32
    return %c0_i32, %c0_i32_0 : i32, i32
  }
  func.func @transform_7(%arg0: i32) -> (i32, i32) {
    %c0_i32 = arith.constant 0 : i32
    %c0_i32_0 = arith.constant 0 : i32
    return %c0_i32, %arg0 : i32, i32
  }
}

</mosaic_0001>

<llo_original>
// kernel: tpu_custom_call.1
$region0: #{tpu_custom_call.1}
  #allocation0 [shape = 'u32[]', space=smem, size = 0x4, offset = 0x4, fixed_abs, tag = 'smem constant byte address 0x4 - core index']
  #allocation1 [shape = 'u32[144,128]{1,0:T(1,128)}', space=vmem, size = 0x12000, scoped, tag = 'internal scratch']
  %s0 = inlined_call_operand.vmem [shape: f32[8,128], index: 0, kind: input, shape index: {}]
  %s1 = inlined_call_operand.vmem [shape: f32[32,8], index: 1, kind: input, shape index: {}]
  %s2 = inlined_call_operand.vmem [shape: f32[32,1], index: 2, kind: input, shape index: {}]
  %s3 = inlined_call_operand.vmem [shape: f32[32,32], index: 3, kind: input, shape index: {}]
  %s4 = inlined_call_operand.vmem [shape: f32[32,1], index: 4, kind: input, shape index: {}]
  %s5 = inlined_call_operand.vmem [shape: f32[2,32], index: 5, kind: input, shape index: {}]
  %s6 = inlined_call_operand.vmem [shape: f32[2,1], index: 6, kind: input, shape index: {}]
  %s7 = inlined_call_operand.hbm [shape: f32[2,128], index: 7, kind: output, shape index: {}]
  %s8 = sld [smem:[#allocation0]]
  $region38: #{tpu_custom_call.1} parent=0
    _
  %s10 = ssub.s32 1, %s8
  %s11 = scalar_select 0, %s10, %s8
  $region1: #{tpu_custom_call.1} parent=0
    #allocation2 [shape = 'u8[1024]{0}', space=vmem, size = 0x400, scoped, tag = 'output window, operand 0, single buffered']
    #allocation3 [shape = 's32[1]{0}', space=sflag, size = 0x4, scoped, tag = 'scoped memory for tpu_custom_call.1']
    %12 = vsyncpa [#allocation3], 0
    // Predicated region
    $region2: #{tpu_custom_call.1} parent=1 // pred_check
      _
    $region3: #{tpu_custom_call.1} parent=1 // pred_check_branch
      %14 = sbr.rel (0) target = $region5
    $region4: #{tpu_custom_call.1} parent=1 // pred_region
      _
    $region5: #{tpu_custom_call.1} parent=1 // pred_fallthru
      _
    // Predicated region
    $region6: #{tpu_custom_call.1} parent=1 // pred_check
      _
    $region7: #{tpu_custom_call.1} parent=1 // pred_check_branch
      %16 = sbr.rel (0) target = $region9
    $region8: #{tpu_custom_call.1} parent=1 // pred_region
      _
    $region9: #{tpu_custom_call.1} parent=1 // pred_fallthru
      _
    // Predicated region
    $region10: #{tpu_custom_call.1} parent=1 // pred_check
      _
    $region11: #{tpu_custom_call.1} parent=1 // pred_check_branch
      %18 = sbr.rel (0) target = $region13
    $region12: #{tpu_custom_call.1} parent=1 // pred_region
      _
    $region13: #{tpu_custom_call.1} parent=1 // pred_fallthru
      _
    // Predicated region
    $region14: #{tpu_custom_call.1} parent=1 // pred_check
      _
    $region15: #{tpu_custom_call.1} parent=1 // pred_check_branch
      %20 = sbr.rel (0) target = $region17
    $region16: #{tpu_custom_call.1} parent=1 // pred_region
      _
    $region17: #{tpu_custom_call.1} parent=1 // pred_fallthru
      _
    // Predicated region
    $region18: #{tpu_custom_call.1} parent=1 // pred_check
      _
    $region19: #{tpu_custom_call.1} parent=1 // pred_check_branch
      %22 = sbr.rel (0) target = $region21
    $region20: #{tpu_custom_call.1} parent=1 // pred_region
      _
    $region21: #{tpu_custom_call.1} parent=1 // pred_fallthru
      _
    // Predicated region
    $region22: #{tpu_custom_call.1} parent=1 // pred_check
      _
    $region23: #{tpu_custom_call.1} parent=1 // pred_check_branch
      %24 = sbr.rel (0) target = $region25
    $region24: #{tpu_custom_call.1} parent=1 // pred_region
      _
    $region25: #{tpu_custom_call.1} parent=1 // pred_fallthru
      _
    // Predicated region
    $region26: #{tpu_custom_call.1} parent=1 // pred_check
      _
    $region27: #{tpu_custom_call.1} parent=1 // pred_check_branch
      %26 = sbr.rel (0) target = $region29
    $region28: #{tpu_custom_call.1} parent=1 // pred_region
      _
    $region29: #{tpu_custom_call.1} parent=1 // pred_fallthru
      _
    %v27 = vld [vmem:[%s0] sm:$0xff]
    %v28 = vld [vmem:[%s1] sm:$0xff]
    %v29 = vld [vmem:[%s1 + $0x8] sm:$0xff]
    %v30 = vld [vmem:[%s1 + $0x10] sm:$0xff]
    %v31 = vld [vmem:[%s1 + $0x18] sm:$0xff]
    %v32 = vld [vmem:[%s2] sm:$0xff]
    %v33 = vld [vmem:[%s2 + $0x8] sm:$0xff]
    %v34 = vld [vmem:[%s2 + $0x10] sm:$0xff]
    %v35 = vld [vmem:[%s2 + $0x18] sm:$0xff]
    %37 = vset.pattern.permute.xlu0 0
    %38 = vperm.xlu0 %37, %v32
    %v39 = vpop.permute.xlu0 %38
    %42 = vset.pattern.permute.xlu0 0
    %43 = vperm.xlu0 %42, %v33
    %v44 = vpop.permute.xlu0 %43
    %47 = vset.pattern.permute.xlu0 0
    %48 = vperm.xlu0 %47, %v34
    %v49 = vpop.permute.xlu0 %48
    %52 = vset.pattern.permute.xlu0 0
    %53 = vperm.xlu0 %52, %v35
    %v54 = vpop.permute.xlu0 %53
    %vm56 = vcmask 64512
    %v58 = vsel %vm56, %v28, 0
    %v61 = vsel %vm56, %v29, 0
    %v64 = vsel %vm56, %v30, 0
    %v67 = vsel %vm56, %v31, 0
    %69 = vmatprep.subr.mxu0 0.0
    %70 = vmatpush1.msra.mxu0 %v27
    %71 = vmatprep.subr.mxu0 0.0
    %72 = vmatpush1.msra.mxu0 0.0
    %73 = vmatprep.subr.mxu0 0.0
    %74 = vmatpush1.msra.mxu0 0.0
    %75 = vmatprep.subr.mxu0 0.0
    %76 = vmatpush1.msra.mxu0 0.0
    %77 = vmatprep.subr.mxu0 0.0
    %78 = vmatpush1.msra.mxu0 0.0
    %79 = vmatprep.subr.mxu0 0.0
    %80 = vmatpush1.msra.mxu0 0.0
    %81 = vmatprep.subr.mxu0 0.0
    %82 = vmatpush1.msra.mxu0 0.0
    %83 = vmatprep.subr.mxu0 0.0
    %84 = vmatpush1.msra.mxu0 0.0
    %85 = vmatprep.subr.mxu0 0.0
    %86 = vmatpush1.msra.mxu0 0.0
    %87 = vmatprep.subr.mxu0 0.0
    %88 = vmatpush1.msra.mxu0 0.0
    %89 = vmatprep.subr.mxu0 0.0
    %90 = vmatpush1.msra.mxu0 0.0
    %91 = vmatprep.subr.mxu0 0.0
    %92 = vmatpush1.msra.mxu0 0.0
    %93 = vmatprep.subr.mxu0 0.0
    %94 = vmatpush1.msra.mxu0 0.0
    %95 = vmatprep.subr.mxu0 0.0
    %96 = vmatpush1.msra.mxu0 0.0
    %97 = vmatprep.subr.mxu0 0.0
    %98 = vmatpush1.msra.mxu0 0.0
    %99 = vmatprep.subr.mxu0 0.0
    %100 = vmatpush1.msra.mxu0 0.0
    %101 = vmatprep.subr.mxu0 0.0
    %102 = vmatpush1.msra.mxu0 0.0
    %103 = vmatprep.subr.mxu0 0.0
    %104 = vmatpush1.msra.mxu0 0.0
    %105 = vmatprep.subr.mxu0 0.0
    %106 = vmatpush1.msra.mxu0 0.0
    %107 = vmatprep.subr.mxu0 0.0
    %108 = vmatpush1.msra.mxu0 0.0
    %109 = vmatprep.subr.mxu0 0.0
    %110 = vmatpush1.msra.mxu0 0.0
    %111 = vmatprep.subr.mxu0 0.0
    %112 = vmatpush1.msra.mxu0 0.0
    %113 = vmatprep.subr.mxu0 0.0
    %114 = vmatpush1.msra.mxu0 0.0
    %115 = vmatprep.subr.mxu0 0.0
    %116 = vmatpush1.msra.mxu0 0.0
    %117 = vmatprep.subr.mxu0 0.0
    %118 = vmatpush1.msra.mxu0 0.0
    %119 = vmatprep.subr.mxu0 0.0
    %120 = vmatpush1.msra.mxu0 0.0
    %121 = vmatprep.subr.mxu0 0.0
    %122 = vmatpush1.msra.mxu0 0.0
    %123 = vmatprep.subr.mxu0 0.0
    %124 = vmatpush1.msra.mxu0 0.0
    %125 = vmatprep.subr.mxu0 0.0
    %126 = vmatpush1.msra.mxu0 0.0
    %127 = vmatprep.subr.mxu0 0.0
    %128 = vmatpush1.msra.mxu0 0.0
    %129 = vmatprep.subr.mxu0 0.0
    %130 = vmatpush1.msra.mxu0 0.0
    %131 = vmatprep.subr.mxu0 0.0
    %132 = vmatpush1.msra.mxu0 0.0
    %133 = vmatprep.mubr.f32.mxu0 0.0
    %134 = vmatmul.mubr.f32.gmra.mrb[0].mxu0 %v58
    %v135 = vpop.f32.mrb[0].mxu0
    %v136 = vadd.f32 %v39, %v135
    %v137 = vpop.f32.mrb[0].mxu0
    %138 = vmatprep.mubr.f32.mxu0 0.0
    %139 = vmatmul.mubr.f32.gmra.mrb[0].mxu0 %v61
    %v140 = vpop.f32.mrb[0].mxu0
    %v141 = vadd.f32 %v44, %v140
    %v142 = vpop.f32.mrb[0].mxu0
    %143 = vmatprep.mubr.f32.mxu0 0.0
    %144 = vmatmul.mubr.f32.gmra.mrb[0].mxu0 %v64
    %v145 = vpop.f32.mrb[0].mxu0
    %v146 = vadd.f32 %v49, %v145
    %v147 = vpop.f32.mrb[0].mxu0
    %148 = vmatprep.mubr.f32.mxu0 0.0
    %149 = vmatmul.mubr.f32.gmra.mrb[0].mxu0 %v67
    %v150 = vpop.f32.mrb[0].mxu0
    %v151 = vadd.f32 %v54, %v150
    %v152 = vpop.f32.mrb[0].mxu0
    %153 = vdwg.mxu0
    %v154 = vmax.f32 %v136, 0.0
    %v155 = vmax.f32 %v141, 0.0
    %v156 = vmax.f32 %v146, 0.0
    %v157 = vmax.f32 %v151, 0.0
    %v158 = vld [vmem:[%s3] sm:$0xff]
    %v159 = vld [vmem:[%s3 + $0x8] sm:$0xff]
    %v160 = vld [vmem:[%s3 + $0x10] sm:$0xff]
    %v161 = vld [vmem:[%s3 + $0x18] sm:$0xff]
    %v162 = vld [vmem:[%s4] sm:$0xff]
    %v163 = vld [vmem:[%s4 + $0x8] sm:$0xff]
    %v164 = vld [vmem:[%s4 + $0x10] sm:$0xff]
    %v165 = vld [vmem:[%s4 + $0x18] sm:$0xff]
    %167 = vset.pattern.permute.xlu0 0
    %168 = vperm.xlu0 %167, %v162
    %v169 = vpop.permute.xlu0 %168
    %172 = vset.pattern.permute.xlu0 0
    %173 = vperm.xlu0 %172, %v163
    %v174 = vpop.permute.xlu0 %173
    %177 = vset.pattern.permute.xlu0 0
    %178 = vperm.xlu0 %177, %v164
    %v179 = vpop.permute.xlu0 %178
    %182 = vset.pattern.permute.xlu0 0
    %183 = vperm.xlu0 %182, %v165
    %v184 = vpop.permute.xlu0 %183
    %vm186 = vcmask 261120
    %v188 = vsel %vm186, %v158, 0
    %v191 = vsel %vm186, %v159, 0
    %v194 = vsel %vm186, %v160, 0
    %v197 = vsel %vm186, %v161, 0
    %199 = vmatprep.subr.mxu0 0.0
    %200 = vmatpush1.msra.mxu0 %v154
    %201 = vmatprep.subr.mxu0 0.0
    %202 = vmatpush1.msra.mxu0 %v155
    %203 = vmatprep.subr.mxu0 0.0
    %204 = vmatpush1.msra.mxu0 %v156
    %205 = vmatprep.subr.mxu0 0.0
    %206 = vmatpush1.msra.mxu0 %v157
    %207 = vmatprep.subr.mxu0 0.0
    %208 = vmatpush1.msra.mxu0 0.0
    %209 = vmatprep.subr.mxu0 0.0
    %210 = vmatpush1.msra.mxu0 0.0
    %211 = vmatprep.subr.mxu0 0.0
    %212 = vmatpush1.msra.mxu0 0.0
    %213 = vmatprep.subr.mxu0 0.0
    %214 = vmatpush1.msra.mxu0 0.0
    %215 = vmatprep.subr.mxu0 0.0
    %216 = vmatpush1.msra.mxu0 0.0
    %217 = vmatprep.subr.mxu0 0.0
    %218 = vmatpush1.msra.mxu0 0.0
    %219 = vmatprep.subr.mxu0 0.0
    %220 = vmatpush1.msra.mxu0 0.0
    %221 = vmatprep.subr.mxu0 0.0
    %222 = vmatpush1.msra.mxu0 0.0
    %223 = vmatprep.subr.mxu0 0.0
    %224 = vmatpush1.msra.mxu0 0.0
    %225 = vmatprep.subr.mxu0 0.0
    %226 = vmatpush1.msra.mxu0 0.0
    %227 = vmatprep.subr.mxu0 0.0
    %228 = vmatpush1.msra.mxu0 0.0
    %229 = vmatprep.subr.mxu0 0.0
    %230 = vmatpush1.msra.mxu0 0.0
    %231 = vmatprep.subr.mxu0 0.0
    %232 = vmatpush1.msra.mxu0 0.0
    %233 = vmatprep.subr.mxu0 0.0
    %234 = vmatpush1.msra.mxu0 0.0
    %235 = vmatprep.subr.mxu0 0.0
    %236 = vmatpush1.msra.mxu0 0.0
    %237 = vmatprep.subr.mxu0 0.0
    %238 = vmatpush1.msra.mxu0 0.0
    %239 = vmatprep.subr.mxu0 0.0
    %240 = vmatpush1.msra.mxu0 0.0
    %241 = vmatprep.subr.mxu0 0.0
    %242 = vmatpush1.msra.mxu0 0.0
    %243 = vmatprep.subr.mxu0 0.0
    %244 = vmatpush1.msra.mxu0 0.0
    %245 = vmatprep.subr.mxu0 0.0
    %246 = vmatpush1.msra.mxu0 0.0
    %247 = vmatprep.subr.mxu0 0.0
    %248 = vmatpush1.msra.mxu0 0.0
    %249 = vmatprep.subr.mxu0 0.0
    %250 = vmatpush1.msra.mxu0 0.0
    %251 = vmatprep.subr.mxu0 0.0
    %252 = vmatpush1.msra.mxu0 0.0
    %253 = vmatprep.subr.mxu0 0.0
    %254 = vmatpush1.msra.mxu0 0.0
    %255 = vmatprep.subr.mxu0 0.0
    %256 = vmatpush1.msra.mxu0 0.0
    %257 = vmatprep.subr.mxu0 0.0
    %258 = vmatpush1.msra.mxu0 0.0
    %259 = vmatprep.subr.mxu0 0.0
    %260 = vmatpush1.msra.mxu0 0.0
    %261 = vmatprep.subr.mxu0 0.0
    %262 = vmatpush1.msra.mxu0 0.0
    %263 = vmatprep.mubr.f32.mxu0 0.0
    %264 = vmatmul.mubr.f32.gmra.mrb[0].mxu0 %v188
    %v265 = vpop.f32.mrb[0].mxu0
    %v266 = vadd.f32 %v169, %v265
    %v267 = vpop.f32.mrb[0].mxu0
    %268 = vmatprep.mubr.f32.mxu0 0.0
    %269 = vmatmul.mubr.f32.gmra.mrb[0].mxu0 %v191
    %v270 = vpop.f32.mrb[0].mxu0
    %v271 = vadd.f32 %v174, %v270
    %v272 = vpop.f32.mrb[0].mxu0
    %273 = vmatprep.mubr.f32.mxu0 0.0
    %274 = vmatmul.mubr.f32.gmra.mrb[0].mxu0 %v194
    %v275 = vpop.f32.mrb[0].mxu0
    %v276 = vadd.f32 %v179, %v275
    %v277 = vpop.f32.mrb[0].mxu0
    %278 = vmatprep.mubr.f32.mxu0 0.0
    %279 = vmatmul.mubr.f32.gmra.mrb[0].mxu0 %v197
    %v280 = vpop.f32.mrb[0].mxu0
    %v281 = vadd.f32 %v184, %v280
    %v282 = vpop.f32.mrb[0].mxu0
    %283 = vdwg.mxu0
    %v284 = vmax.f32 %v266, 0.0
    %v285 = vmax.f32 %v271, 0.0
    %v286 = vmax.f32 %v276, 0.0
    %v287 = vmax.f32 %v281, 0.0
    %v288 = vld [vmem:[%s5] sm:$0x3]
    %v289 = vld [vmem:[%s6] sm:$0x3]
    %291 = vset.pattern.permute.xlu0 0
    %292 = vperm.xlu0 %291, %v289
    %v293 = vpop.permute.xlu0 %292
    %v296 = vsel %vm186, %v288, 0
    %298 = vmatprep.subr.mxu0 0.0
    %299 = vmatpush1.msra.mxu0 %v284
    %300 = vmatprep.subr.mxu0 0.0
    %301 = vmatpush1.msra.mxu0 %v285
    %302 = vmatprep.subr.mxu0 0.0
    %303 = vmatpush1.msra.mxu0 %v286
    %304 = vmatprep.subr.mxu0 0.0
    %305 = vmatpush1.msra.mxu0 %v287
    %306 = vmatprep.subr.mxu0 0.0
    %307 = vmatpush1.msra.mxu0 0.0
    %308 = vmatprep.subr.mxu0 0.0
    %309 = vmatpush1.msra.mxu0 0.0
    %310 = vmatprep.subr.mxu0 0.0
    %311 = vmatpush1.msra.mxu0 0.0
    %312 = vmatprep.subr.mxu0 0.0
    %313 = vmatpush1.msra.mxu0 0.0
    %314 = vmatprep.subr.mxu0 0.0
    %315 = vmatpush1.msra.mxu0 0.0
    %316 = vmatprep.subr.mxu0 0.0
    %317 = vmatpush1.msra.mxu0 0.0
    %318 = vmatprep.subr.mxu0 0.0
    %319 = vmatpush1.msra.mxu0 0.0
    %320 = vmatprep.subr.mxu0 0.0
    %321 = vmatpush1.msra.mxu0 0.0
    %322 = vmatprep.subr.mxu0 0.0
    %323 = vmatpush1.msra.mxu0 0.0
    %324 = vmatprep.subr.mxu0 0.0
    %325 = vmatpush1.msra.mxu0 0.0
    %326 = vmatprep.subr.mxu0 0.0
    %327 = vmatpush1.msra.mxu0 0.0
    %328 = vmatprep.subr.mxu0 0.0
    %329 = vmatpush1.msra.mxu0 0.0
    %330 = vmatprep.subr.mxu0 0.0
    %331 = vmatpush1.msra.mxu0 0.0
    %332 = vmatprep.subr.mxu0 0.0
    %333 = vmatpush1.msra.mxu0 0.0
    %334 = vmatprep.subr.mxu0 0.0
    %335 = vmatpush1.msra.mxu0 0.0
    %336 = vmatprep.subr.mxu0 0.0
    %337 = vmatpush1.msra.mxu0 0.0
    %338 = vmatprep.subr.mxu0 0.0
    %339 = vmatpush1.msra.mxu0 0.0
    %340 = vmatprep.subr.mxu0 0.0
    %341 = vmatpush1.msra.mxu0 0.0
    %342 = vmatprep.subr.mxu0 0.0
    %343 = vmatpush1.msra.mxu0 0.0
    %344 = vmatprep.subr.mxu0 0.0
    %345 = vmatpush1.msra.mxu0 0.0
    %346 = vmatprep.subr.mxu0 0.0
    %347 = vmatpush1.msra.mxu0 0.0
    %348 = vmatprep.subr.mxu0 0.0
    %349 = vmatpush1.msra.mxu0 0.0
    %350 = vmatprep.subr.mxu0 0.0
    %351 = vmatpush1.msra.mxu0 0.0
    %352 = vmatprep.subr.mxu0 0.0
    %353 = vmatpush1.msra.mxu0 0.0
    %354 = vmatprep.subr.mxu0 0.0
    %355 = vmatpush1.msra.mxu0 0.0
    %356 = vmatprep.subr.mxu0 0.0
    %357 = vmatpush1.msra.mxu0 0.0
    %358 = vmatprep.subr.mxu0 0.0
    %359 = vmatpush1.msra.mxu0 0.0
    %360 = vmatprep.subr.mxu0 0.0
    %361 = vmatpush1.msra.mxu0 0.0
    %362 = vmatprep.mubr.f32.mxu0 0.0
    %363 = vmatmul.mubr.f32.gmra.mrb[0].mxu0 %v296
    %v364 = vpop.f32.mrb[0].mxu0
    %v365 = vadd.f32 %v293, %v364
    %v366 = vpop.f32.mrb[0].mxu0
    %367 = vdwg.mxu0
    %v368 = vtanh.pop %v365
    %v369 = vmul.f32 %v368, 0.5
    %v370 = vadd.f32 %v369, 0.5
    %371 = vst [vmem:[#allocation2] sm:$0x1] %v370
    %372 = vst [vmem:[#allocation2] sm:$0x2] %v368
    // Predicated region
    $region30: #{tpu_custom_call.1} parent=1 // pred_check
      _
    $region31: #{tpu_custom_call.1} parent=1 // pred_check_branch
      %374 = sbr.rel (0) target = $region33
    $region32: #{tpu_custom_call.1} parent=1 // pred_region
      %s376 = ssub.s32 32, 32
      %377 = vsyncadd [#allocation3], %s376
      %s379 = sshll.u32 [#allocation2], 4
      %s380 = int_to_ptr.vmem [resolvable:$true] %s379
      %382 = dma.vmem_to_hbm [thread:$0]  %s380, 32, %s7, [#allocation3]
    $region33: #{tpu_custom_call.1} parent=1 // pred_fallthru
      _
    // Predicated region
    $region34: #{tpu_custom_call.1} parent=1 // pred_check
      _
    $region35: #{tpu_custom_call.1} parent=1 // pred_check_branch
      %384 = sbr.rel (0) target = $region37
    $region36: #{tpu_custom_call.1} parent=1 // pred_region
      %385 = dma.done [#allocation3], 32
    $region37: #{tpu_custom_call.1} parent=1 // pred_fallthru
      _
    %386 = vsyncpa [#allocation3], 1

</llo_original>
